<compile_context>
chip_gen: v7x
topology: tpu7x:2x2x1
jax: 0.10.0
libtpu: 0.0.40
codegen_flags: <defaults>
</compile_context>

<pallas_src>
import functools

import jax
import jax.numpy as jnp
from jax.experimental import pallas as pl
from jax.experimental.pallas import tpu as pltpu


_VMEM_LIMIT = 48 * 1024 * 1024  # <= scoped/physical budget on v5e/v6e/v7x


# ---------------------------------------------------------------------------
# Padding / tiling helpers
# ---------------------------------------------------------------------------

def _round_up(n, m):
    return ((n + m - 1) // m) * m


def _m_pad_tile(m):
    """Pad an M extent: single tile (multiple of 16) below 256, else 256-tiles."""
    if m <= 256:
        mp = _round_up(m, 16)
        return mp, mp
    mp = _round_up(m, 256)
    return mp, 256


def _n_pad(n):
    return _round_up(n, 128)


# ---------------------------------------------------------------------------
# Pallas kernels
# ---------------------------------------------------------------------------

def _matmul_bn_kernel(a_ref, b_ref, o_ref, s_ref):
    """Grouped GEMM (full-K, one MXU pass per tile) with fused BN statistics.

    grid = (n_tiles, groups, m_tiles).  The per-(group, n-tile) stats block
    stays resident in VMEM across the innermost M axis (accumulator pattern).
    """
    acc = jnp.dot(a_ref[0], b_ref[...], preferred_element_type=jnp.float32)
    o_ref[0] = acc

    @pl.when(pl.program_id(2) == 0)
    def _():
        s_ref[...] = jnp.zeros_like(s_ref)

    s = jnp.sum(acc, axis=0, keepdims=True)
    ss = jnp.sum(acc * acc, axis=0, keepdims=True)
    s_ref[0] = s_ref[0] + jnp.concatenate([s, ss], axis=0)


def _bn_apply_kernel(x_ref, sc_ref, sh_ref, o_ref):
    """Fused y = relu(x * scale + shift); f32 math, bf16 store."""
    y = x_ref[0] * sc_ref[0] + sh_ref[0]
    o_ref[0] = jnp.maximum(y, 0.0).astype(o_ref.dtype)


def _pool_kernel(x_ref, o_ref, *, k, op):
    """Dense (stride-1) kxk window reduction in VMEM; bf16 in/out, f32 math."""
    # TODO(synk): stride is still handled by a cheap XLA subsample after the
    # dense reduction; in-kernel strided windows would cut ~4x compute on the
    # three stride-2 pools in this net.
    x = x_ref[...].astype(jnp.float32)
    oh = x.shape[1] - k + 1
    ow = x.shape[2] - k + 1
    acc = None
    for i in range(k):
        for j in range(k):
            win = x[:, i:i + oh, j:j + ow, :]
            if acc is None:
                acc = win
            elif op == "max":
                acc = jnp.maximum(acc, win)
            else:
                acc = acc + win
    if op == "avg":                                    # count_include_pad=True
        acc = acc * (1.0 / (k * k))
    o_ref[...] = acc.astype(o_ref.dtype)


def _gap_kernel(x_ref, o_ref, *, inv_hw):
    """Global average pool over the spatial dims (bf16 in, f32 out)."""
    x = x_ref[...].astype(jnp.float32)
    o_ref[...] = jnp.sum(x, axis=(1, 2)) * inv_hw


def _cam_kernel(w_ref, f_ref, o_ref, *, hw):
    """CAM = (1,C) @ (C,HW) with fused masked min/max normalization."""
    cam = jnp.dot(w_ref[0], f_ref[0], preferred_element_type=jnp.float32)  # (1, hwp)
    col = jax.lax.broadcasted_iota(jnp.int32, cam.shape, 1)
    valid = col < hw
    big = jnp.finfo(jnp.float32).max
    cmax = jnp.max(jnp.where(valid, cam, -big), axis=1, keepdims=True)
    cmin = jnp.min(jnp.where(valid, cam, big), axis=1, keepdims=True)
    denom = jnp.maximum(cmax - cmin, 1e-12)            # guard constant CAMs
    o_ref[0] = (cam - cmin) / denom


# ---------------------------------------------------------------------------
# Pallas wrappers (jitted so identical padded shapes reuse compiled kernels)
# ---------------------------------------------------------------------------

@jax.jit
def _matmul_bn_padded(a, b):
    """a: (G, Mp, Kp) bf16, b: (Kp, Np) bf16 ->
       (conv (G, Mp, Np) f32, stats (G, 2, Np) f32 = [sum; sumsq] over M)."""
    g, mp, kp = a.shape
    _, np_ = b.shape
    tm = mp if mp <= 256 else 256
    tn = np_ if np_ <= 512 else (256 if np_ % 256 == 0 else 128)
    return pl.pallas_call(
        _matmul_bn_kernel,
        out_shape=(jax.ShapeDtypeStruct((g, mp, np_), jnp.float32),
                   jax.ShapeDtypeStruct((g, 2, np_), jnp.float32)),
        grid=(np_ // tn, g, mp // tm),
        in_specs=[pl.BlockSpec((1, tm, kp), lambda j, gi, i: (gi, i, 0)),
                  pl.BlockSpec((kp, tn), lambda j, gi, i: (0, j))],
        out_specs=[pl.BlockSpec((1, tm, tn), lambda j, gi, i: (gi, i, j)),
                   pl.BlockSpec((1, 2, tn), lambda j, gi, i: (gi, 0, j))],
        compiler_params=pltpu.CompilerParams(
            dimension_semantics=("parallel", "parallel", "arbitrary"),
            vmem_limit_bytes=_VMEM_LIMIT),
    )(a, b)


@jax.jit
def _bn_apply_padded(x, scale, shift):
    """y = relu(x * scale + shift) -> bf16, tiled over M, megacore-parallel."""
    g, mp, cp = x.shape
    tm = mp if mp <= 256 else 256
    return pl.pallas_call(
        _bn_apply_kernel,
        out_shape=jax.ShapeDtypeStruct((g, mp, cp), jnp.bfloat16),
        grid=(g, mp // tm),
        in_specs=[pl.BlockSpec((1, tm, cp), lambda gi, i: (gi, i, 0)),
                  pl.BlockSpec((1, 1, cp), lambda gi, i: (gi, 0, 0)),
                  pl.BlockSpec((1, 1, cp), lambda gi, i: (gi, 0, 0))],
        out_specs=pl.BlockSpec((1, tm, cp), lambda gi, i: (gi, i, 0)),
        compiler_params=pltpu.CompilerParams(
            dimension_semantics=("parallel", "parallel"),
            vmem_limit_bytes=_VMEM_LIMIT),
    )(x, scale, shift)


@functools.partial(jax.jit, static_argnames=("k", "op"))
def _pool_dense_padded(x, *, k, op):
    """x: (N, Hp, Wp, Cp) bf16 -> dense (stride-1) window reduction (bf16)."""
    n, hp, wp, cp = x.shape
    ohd, owd = hp - k + 1, wp - k + 1
    tb = 4 if n % 4 == 0 else n
    tc = cp if cp <= 512 else (256 if cp % 256 == 0 else 128)
    kern = functools.partial(_pool_kernel, k=k, op=op)
    return pl.pallas_call(
        kern,
        out_shape=jax.ShapeDtypeStruct((n, ohd, owd, cp), jnp.bfloat16),
        grid=(n // tb, cp // tc),
        in_specs=[pl.BlockSpec((tb, hp, wp, tc), lambda bi, c: (bi, 0, 0, c))],
        out_specs=pl.BlockSpec((tb, ohd, owd, tc), lambda bi, c: (bi, 0, 0, c)),
        compiler_params=pltpu.CompilerParams(
            dimension_semantics=("parallel", "parallel"),
            vmem_limit_bytes=_VMEM_LIMIT),
    )(x)


@jax.jit
def _gap_padded(x):
    """x: (N, H, W, Cp) bf16 -> (N, Cp) f32 global average."""
    n, h, w, cp = x.shape
    tc = cp if cp <= 512 else (256 if cp % 256 == 0 else 128)
    kern = functools.partial(_gap_kernel, inv_hw=1.0 / float(h * w))
    return pl.pallas_call(
        kern,
        out_shape=jax.ShapeDtypeStruct((n, cp), jnp.float32),
        grid=(cp // tc,),
        in_specs=[pl.BlockSpec((n, h, w, tc), lambda c: (0, 0, 0, c))],
        out_specs=pl.BlockSpec((n, tc), lambda c: (0, c)),
        compiler_params=pltpu.CompilerParams(
            dimension_semantics=("parallel",),
            vmem_limit_bytes=_VMEM_LIMIT),
    )(x)


@functools.partial(jax.jit, static_argnames=("hw",))
def _cam_padded(w_sel, f_sel, *, hw):
    """w_sel: (Gb, 1, Cp), f_sel: (Gb, Cp, HWp) -> normalized CAMs (Gb, 1, HWp)."""
    gb, _, cp = w_sel.shape
    hwp = f_sel.shape[-1]
    kern = functools.partial(_cam_kernel, hw=hw)
    return pl.pallas_call(
        kern,
        out_shape=jax.ShapeDtypeStruct((gb, 1, hwp), jnp.float32),
        grid=(gb,),
        in_specs=[pl.BlockSpec((1, 1, cp), lambda g: (g, 0, 0)),
                  pl.BlockSpec((1, cp, hwp), lambda g: (g, 0, 0))],
        out_specs=pl.BlockSpec((1, 1, hwp), lambda g: (g, 0, 0)),
        compiler_params=pltpu.CompilerParams(
            dimension_semantics=("parallel",),
            vmem_limit_bytes=_VMEM_LIMIT),
    )(w_sel, f_sel)


def pallas_matmul(a, w):
    """General (M,K)x(K,N) matmul (bf16 operands, f32 accumulate, full-K)."""
    m, k = a.shape
    _, n = w.shape
    mp, _ = _m_pad_tile(m)
    kp, np_ = _n_pad(k), _n_pad(n)
    a_p = jnp.pad(a.astype(jnp.bfloat16), ((0, mp - m), (0, kp - k)))[None]
    w_p = jnp.pad(w.astype(jnp.bfloat16), ((0, kp - k), (0, np_ - n)))
    out, _ = _matmul_bn_padded(a_p, w_p)   # stats output unused here
    return out[0, :m, :n]


# ---------------------------------------------------------------------------
# Glue: im2col, conv+bn+relu, pooling
# ---------------------------------------------------------------------------

def _im2col(x, kh, kw, sh, sw, ph, pw):
    n, h, w, c = x.shape
    if ph or pw:
        x = jnp.pad(x, ((0, 0), (ph, ph), (pw, pw), (0, 0)))
    hp, wp = h + 2 * ph, w + 2 * pw
    oh = (hp - kh) // sh + 1
    ow = (wp - kw) // sw + 1
    cols = []
    for i in range(kh):
        for j in range(kw):
            cols.append(x[:, i:i + (oh - 1) * sh + 1:sh,
                          j:j + (ow - 1) * sw + 1:sw, :])
    pat = jnp.stack(cols, axis=3)                     # (n, oh, ow, kh*kw, c)
    return pat.reshape(n * oh * ow, kh * kw * c), (n, oh, ow)


def basic_conv(x, p, groups):
    """Conv2d(bias=False) + BatchNorm2d(train mode, per-group stats) + ReLU."""
    kh, kw = p["kh"], p["kw"]
    sh, sw = p["stride"]
    ph, pw = p["pad"]
    cout = p["cout"]
    w_p = p["w_p"]                                    # (Kp, Cp) bf16, pre-laid-out
    kp, cp = w_p.shape

    x = x.astype(jnp.bfloat16)
    n = x.shape[0]
    if kh == 1 and kw == 1 and (sh, sw) == (1, 1) and (ph, pw) == (0, 0):
        # 1x1 stride-1 fast path: patches are just a reshape (no im2col copy).
        _, oh, ow, c = x.shape
        patches = x.reshape(n * oh * ow, c)
    else:
        patches, (n, oh, ow) = _im2col(x, kh, kw, sh, sw, ph, pw)

    m, k = patches.shape
    mg = m // groups                                  # rows per BN group
    mgp, _ = _m_pad_tile(mg)
    a = patches.reshape(groups, mg, k)
    a = jnp.pad(a, ((0, 0), (0, mgp - mg), (0, kp - k)))

    # Fused GEMM + per-group BN statistics (padded rows/cols are exactly zero).
    conv, stats = _matmul_bn_padded(a, w_p)           # (G, mgp, cp) f32, (G, 2, cp)

    gamma = p["g_p"].reshape(1, 1, cp)
    beta = p["b_p"].reshape(1, 1, cp)
    inv_mg = 1.0 / float(mg)
    mean = stats[:, 0:1, :] * inv_mg
    # TODO(synk): single-pass E[x^2]-E[x]^2 can cancel for large-mean activations;
    # kept (with clamp) to match the original kernel's BN formulation.
    var = jnp.maximum(stats[:, 1:2, :] * inv_mg - mean * mean, 0.0)
    inv = jax.lax.rsqrt(var + 1e-5)
    scale = inv * gamma                               # (G, 1, cp)
    shift = beta - mean * scale

    y = _bn_apply_padded(conv, scale, shift)          # (G, mgp, cp) bf16
    return y[:, :mg, :cout].reshape(n, oh, ow, cout)


def pool2d(x, k, stride, padding, op):
    # zero padding only used by avg pools (count_include_pad=True); the single
    # max pool in this net uses padding=0 so zero-padding never corrupts a max.
    n, h, w, c = x.shape
    x = x.astype(jnp.bfloat16)
    if padding:
        x = jnp.pad(x, ((0, 0), (padding, padding), (padding, padding), (0, 0)))
    cp = _n_pad(c)
    if cp != c:
        x = jnp.pad(x, ((0, 0), (0, 0), (0, 0), (0, cp - c)))
    dense = _pool_dense_padded(x, k=k, op=op)         # stride-1 window reduce
    oh = (h + 2 * padding - k) // stride + 1
    ow = (w + 2 * padding - k) // stride + 1
    return dense[:, ::stride, ::stride, :][:, :oh, :ow, :c]


def avg_pool(x, k, stride, padding):
    return pool2d(x, k, stride, padding, "avg")


def max_pool(x, k, stride, padding):
    return pool2d(x, k, stride, padding, "max")


def global_avg_pool(x):
    # TODO(synk): reference forward calls self.avgpool which is never defined
    # (only self.avg = AdaptiveAvgPool2d((1,1))); implemented as global avg pool.
    n, h, w, c = x.shape
    x = x.astype(jnp.bfloat16)
    cp = _n_pad(c)
    if cp != c:
        x = jnp.pad(x, ((0, 0), (0, 0), (0, 0), (0, cp - c)))
    return _gap_padded(x)[:, :c]


# ---------------------------------------------------------------------------
# Parameter init (deterministic, mirrors the PyTorch __init__ shapes)
# ---------------------------------------------------------------------------

class _KeyGen:
    def __init__(self, key):
        self._key = key
        self._n = 0

    def __call__(self):
        self._n += 1
        return jax.random.fold_in(self._key, self._n)


def _pair(v):
    return v if isinstance(v, tuple) else (v, v)


def init_basic_conv(kg, cin, cout, kernel_size, stride=1, padding=0):
    kh, kw = _pair(kernel_size)
    k1, k2, k3 = jax.random.split(kg(), 3)
    fan_in = float(cin * kh * kw)
    w = jax.random.normal(k1, (cout, cin, kh, kw), jnp.float32) * (1.0 / fan_in ** 0.5)
    g = 1.0 + 0.1 * jax.random.normal(k2, (cout,), jnp.float32)
    bvec = 0.1 * jax.random.normal(k3, (cout,), jnp.float32)

    # Pre-laid-out GEMM weight (transpose/pad/bf16 hoisted out of the forward).
    k = kh * kw * cin
    kp, cp = _n_pad(k), _n_pad(cout)
    wmat = jnp.transpose(w, (2, 3, 1, 0)).reshape(k, cout).astype(jnp.bfloat16)
    w_p = jnp.pad(wmat, ((0, kp - k), (0, cp - cout)))
    return {"w_p": w_p,
            "g_p": jnp.pad(g, (0, cp - cout)),
            "b_p": jnp.pad(bvec, (0, cp - cout)),
            "cout": cout, "kh": kh, "kw": kw,
            "stride": _pair(stride), "pad": _pair(padding)}


def _seq(x, plist, groups):
    for p in plist:
        x = basic_conv(x, p, groups)
    return x


# ----- InceptionA -----
def init_inception_a(kg, cin, pool_features):
    return {
        "b1x1": init_basic_conv(kg, cin, 64, 1),
        "b5x5": [init_basic_conv(kg, cin, 48, 1),
                 init_basic_conv(kg, 48, 64, 5, padding=2)],
        "b3x3": [init_basic_conv(kg, cin, 64, 1),
                 init_basic_conv(kg, 64, 96, 3, padding=1),
                 init_basic_conv(kg, 96, 96, 3, padding=1)],
        "bpool": init_basic_conv(kg, cin, pool_features, 3, padding=1),
    }


def inception_a(x, p, groups):
    b1 = basic_conv(x, p["b1x1"], groups)
    b5 = _seq(x, p["b5x5"], groups)
    b3 = _seq(x, p["b3x3"], groups)
    bp = basic_conv(avg_pool(x, 3, 1, 1), p["bpool"], groups)
    return jnp.concatenate([b1, b5, b3, bp], axis=-1)


# ----- InceptionB -----
def init_inception_b(kg, cin):
    return {
        "b3x3": init_basic_conv(kg, cin, 384, 3, stride=2),
        "stack": [init_basic_conv(kg, cin, 64, 1),
                  init_basic_conv(kg, 64, 96, 3, padding=1),
                  init_basic_conv(kg, 96, 96, 3, stride=2)],
    }


def inception_b(x, p, groups):
    b3 = basic_conv(x, p["b3x3"], groups)
    st = _seq(x, p["stack"], groups)
    bp = max_pool(x, 3, 2, 0)
    return jnp.concatenate([b3, st, bp], axis=-1)


# ----- InceptionC -----
def init_inception_c(kg, cin, c7):
    return {
        "b1x1": init_basic_conv(kg, cin, 192, 1),
        "b7x7": [init_basic_conv(kg, cin, c7, 1),
                 init_basic_conv(kg, c7, c7, (7, 1), padding=(3, 0)),
                 init_basic_conv(kg, c7, 192, (1, 7), padding=(0, 3))],
        "stack": [init_basic_conv(kg, cin, c7, 1),
                  init_basic_conv(kg, c7, c7, (7, 1), padding=(3, 0)),
                  init_basic_conv(kg, c7, c7, (1, 7), padding=(0, 3)),
                  init_basic_conv(kg, c7, c7, (7, 1), padding=(3, 0)),
                  init_basic_conv(kg, c7, 192, (1, 7), padding=(0, 3))],
        "bpool": init_basic_conv(kg, cin, 192, 1),
    }


def inception_c(x, p, groups):
    b1 = basic_conv(x, p["b1x1"], groups)
    b7 = _seq(x, p["b7x7"], groups)
    st = _seq(x, p["stack"], groups)
    bp = basic_conv(avg_pool(x, 3, 1, 1), p["bpool"], groups)
    return jnp.concatenate([b1, b7, st, bp], axis=-1)


# ----- InceptionD -----
def init_inception_d(kg, cin):
    return {
        "b3x3": [init_basic_conv(kg, cin, 192, 1),
                 init_basic_conv(kg, 192, 320, 3, stride=2)],
        "b7x7": [init_basic_conv(kg, cin, 192, 1),
                 init_basic_conv(kg, 192, 192, (1, 7), padding=(0, 3)),
                 init_basic_conv(kg, 192, 192, (7, 1), padding=(3, 0)),
                 init_basic_conv(kg, 192, 192, 3, stride=2)],
    }


def inception_d(x, p, groups):
    b3 = _seq(x, p["b3x3"], groups)
    b7 = _seq(x, p["b7x7"], groups)
    bp = avg_pool(x, 3, 2, 0)
    return jnp.concatenate([b3, b7, bp], axis=-1)


# ----- InceptionE -----
def init_inception_e(kg, cin):
    return {
        "b1x1": init_basic_conv(kg, cin, 320, 1),
        "b3_1": init_basic_conv(kg, cin, 384, 1),
        "b3_2a": init_basic_conv(kg, 384, 384, (1, 3), padding=(0, 1)),
        "b3_2b": init_basic_conv(kg, 384, 384, (3, 1), padding=(1, 0)),
        "s1": init_basic_conv(kg, cin, 448, 1),
        "s2": init_basic_conv(kg, 448, 384, 3, padding=1),
        "s3a": init_basic_conv(kg, 384, 384, (1, 3), padding=(0, 1)),
        "s3b": init_basic_conv(kg, 384, 384, (3, 1), padding=(1, 0)),
        "bpool": init_basic_conv(kg, cin, 192, 1),
    }


def inception_e(x, p, groups):
    b1 = basic_conv(x, p["b1x1"], groups)
    b3 = basic_conv(x, p["b3_1"], groups)
    b3 = jnp.concatenate([basic_conv(b3, p["b3_2a"], groups),
                          basic_conv(b3, p["b3_2b"], groups)], axis=-1)
    st = basic_conv(basic_conv(x, p["s1"], groups), p["s2"], groups)
    st = jnp.concatenate([basic_conv(st, p["s3a"], groups),
                          basic_conv(st, p["s3b"], groups)], axis=-1)
    bp = basic_conv(avg_pool(x, 3, 1, 1), p["bpool"], groups)
    return jnp.concatenate([b1, b3, st, bp], axis=-1)


# ---------------------------------------------------------------------------
# Full model
# ---------------------------------------------------------------------------

def init_model(key, num_classes=2):
    kg = _KeyGen(key)
    p = {
        "c1a": init_basic_conv(kg, 2, 32, 3, padding=1),
        "c2a": init_basic_conv(kg, 32, 32, 3, padding=1),
        "c2b": init_basic_conv(kg, 32, 64, 3, padding=1),
        "c3b": init_basic_conv(kg, 64, 80, 1),
        "c4a": init_basic_conv(kg, 80, 192, 3),
        "m5b": init_inception_a(kg, 192, 32),
        "m5c": init_inception_a(kg, 256, 64),
        "m5d": init_inception_a(kg, 288, 64),
        "m6a": init_inception_b(kg, 288),
        "m6b": init_inception_c(kg, 768, 128),
        "m6c": init_inception_c(kg, 768, 160),
        "m6d": init_inception_c(kg, 768, 160),
        "m6e": init_inception_c(kg, 768, 192),
        "m7a": init_inception_d(kg, 768),
        "m7b": init_inception_e(kg, 1280),
    }
    # TODO(synk): reference builds Mixed_7c = InceptionE(512), inconsistent with the
    # 2048-channel output of Mixed_7b (would crash in PyTorch); instantiated with 2048.
    p["m7c"] = init_inception_e(kg, 2048)

    # TODO(synk): reference declares nn.Linear(2048, num_classes) but concatenates four
    # 2048-d pooled vectors (8192 features); classifier instantiated with 8192.
    in_features = 4 * 2048
    kc1, kc2 = jax.random.split(kg(), 2)
    p["fc_w"] = jax.random.normal(kc1, (num_classes, in_features), jnp.float32) \
        * (1.0 / in_features ** 0.5)
    p["fc_b"] = 0.01 * jax.random.normal(kc2, (num_classes,), jnp.float32)
    return p


def backbone(params, x_nchw, groups):
    x = jnp.transpose(x_nchw, (0, 2, 3, 1)).astype(jnp.float32)   # NCHW -> NHWC
    x = basic_conv(x, params["c1a"], groups)
    x = basic_conv(x, params["c2a"], groups)
    x = basic_conv(x, params["c2b"], groups)
    x = basic_conv(x, params["c3b"], groups)
    x = basic_conv(x, params["c4a"], groups)
    x = inception_a(x, params["m5b"], groups)
    x = inception_a(x, params["m5c"], groups)
    x = inception_a(x, params["m5d"], groups)
    x = inception_b(x, params["m6a"], groups)
    x = inception_c(x, params["m6b"], groups)
    x = inception_c(x, params["m6c"], groups)
    x = inception_c(x, params["m6d"], groups)
    x = inception_c(x, params["m6e"], groups)
    x = inception_d(x, params["m7a"], groups)
    x = inception_e(x, params["m7b"], groups)
    x = inception_e(x, params["m7c"], groups)
    return x   # NHWC bf16, batch = 4*B


def inception_v3_forward(params, x1, x2, y1, y2, b):
    # Single batched backbone pass (BN statistics stay per-original-call via the
    # explicit group dimension inside the fused conv+BN kernels).
    xcat = jnp.concatenate([x1, x2, y1, y2], axis=0)              # (4b, C, H, W)
    feat = backbone(params, xcat, groups=4)                        # (4b, h, w, C) bf16
    n_all, fh, fw, c1 = feat.shape

    pooled = global_avg_pool(feat)                                 # (4b, C) f32
    o1, o2, o11, o21 = (pooled[0:b], pooled[b:2 * b],
                        pooled[2 * b:3 * b], pooled[3 * b:4 * b])
    output = jnp.concatenate([o1, o2], axis=1)
    output22 = jnp.concatenate([o11, o21], axis=1)
    output = jnp.concatenate([output, output22], axis=1)           # (b, 4*C)

    logits = pallas_matmul(output, params["fc_w"].T) + params["fc_b"][None, :]
    preds = jnp.argmax(logits, axis=1)

    w = params["fc_w"]
    fcw = [w[:, g * c1:(g + 1) * c1] for g in range(4)]
    feat_f32 = feat.astype(jnp.float32)
    feat1, feat2 = feat_f32[0:b], feat_f32[b:2 * b]
    feat11, feat21 = feat_f32[2 * b:3 * b], feat_f32[3 * b:4 * b]

    # NOTE: the reference loops reuse the stale loop variables `i` and `ii`
    # (both equal b-1 after their loops); replicated faithfully below.
    stale = b - 1
    rows, maps = [], []
    for i in range(b):
        rows.append(fcw[0][preds[i]]);        maps.append(feat1[i])
    for ii in range(b):
        rows.append(fcw[1][preds[stale]]);    maps.append(feat2[ii])
    for _ in range(b):
        rows.append(fcw[2][preds[stale]]);    maps.append(feat11[stale])
    for _ in range(b):
        rows.append(fcw[3][preds[stale]]);    maps.append(feat21[stale])

    # Batched CAM computation with fused min/max normalization: one Pallas call.
    hw = fh * fw
    cp = _n_pad(c1)
    hwp = _n_pad(hw)
    w_sel = jnp.pad(jnp.stack(rows), ((0, 0), (0, cp - c1)))[:, None, :]      # (4b,1,Cp)
    f_sel = jnp.transpose(jnp.stack(maps).reshape(4 * b, hw, c1), (0, 2, 1))   # (4b,C,hw)
    f_sel = jnp.pad(f_sel, ((0, 0), (0, cp - c1), (0, hwp - hw)))
    # TODO(synk): size_upsample=(512,256) in the reference returnCAM is never used.
    cams = _cam_padded(w_sel, f_sel, hw=hw)[:, 0, :hw].reshape(4 * b, fh, fw)

    cam_list = [cams[i] for i in range(4 * b)]
    return (logits,
            cam_list[0:b], cam_list[b:2 * b],
            cam_list[2 * b:3 * b], cam_list[3 * b:4 * b])


# ---------------------------------------------------------------------------
# Main
# ---------------------------------------------------------------------------

if __name__ == "__main__":
    key = jax.random.PRNGKey(0)
    params = init_model(key, num_classes=2)

    B, C, H, W = 2, 2, 16, 16
    kx = jax.random.split(jax.random.fold_in(key, 999), 4)
    x1 = jax.random.normal(kx[0], (B, C, H, W), jnp.float32)
    x2 = jax.random.normal(kx[1], (B, C, H, W), jnp.float32)
    y1 = jax.random.normal(kx[2], (B, C, H, W), jnp.float32)
    y2 = jax.random.normal(kx[3], (B, C, H, W), jnp.float32)

    out = inception_v3_forward(params, x1, x2, y1, y2, b=B)
    out = jax.block_until_ready(out)

    logits = out[0]
    assert logits.shape == (B, 2)
    assert len(out[1]) == B and out[1][0].shape == (2, 2)
    print("KERNEL_OK")
</pallas_src>

<mosaic_0001>
module attributes {stable_mosaic.version = 11 : i64} {
  func.func @_matmul_bn_kernel(%arg0: i32, %arg1: i32, %arg2: i32, %arg3: memref<1x256x128xbf16, #tpu.memory_space<vmem>>, %arg4: memref<128x128xbf16, #tpu.memory_space<vmem>>, %arg5: memref<1x256x128xf32, #tpu.memory_space<vmem>>, %arg6: memref<1x2x128xf32, #tpu.memory_space<vmem>>) attributes {dimension_semantics = [#tpu.dimension_semantics<parallel>, #tpu.dimension_semantics<parallel>, #tpu.dimension_semantics<arbitrary>], iteration_bounds = array<i64: 1, 4, 2>, scalar_prefetch = 0 : i64, scratch_operands = 0 : i64, tpu.core_type = #tpu.core_type<tc>, window_params = [{transform_indices = @transform_0, window_bounds = array<i64: 1, 256, 128>}, {transform_indices = @transform_1, window_bounds = array<i64: 128, 128>}, {transform_indices = @transform_2, window_bounds = array<i64: 1, 256, 128>}, {transform_indices = @transform_3, window_bounds = array<i64: 1, 2, 128>}]} {
    %c0 = arith.constant 0 : index
    %c0_0 = arith.constant 0 : index
    %c0_1 = arith.constant 0 : index
    %0 = vector.load %arg3[%c0, %c0_0, %c0_1] : memref<1x256x128xbf16, #tpu.memory_space<vmem>>, vector<1x256x128xbf16>
    %1 = vector.shape_cast %0 : vector<1x256x128xbf16> to vector<256x128xbf16>
    %c0_2 = arith.constant 0 : index
    %c0_3 = arith.constant 0 : index
    %2 = vector.load %arg4[%c0_2, %c0_3] : memref<128x128xbf16, #tpu.memory_space<vmem>>, vector<128x128xbf16>
    %cst = arith.constant dense<0.000000e+00> : vector<256x128xf32>
    %3 = tpu.matmul %1, %2, %cst {dimension_numbers = #tpu.dot_dimension_numbers<[1], [0], [0], [1], [0, 0, 1, 1], [], []>} : vector<256x128xbf16>, vector<128x128xbf16>, vector<256x128xf32> -> vector<256x128xf32>
    %c0_4 = arith.constant 0 : index
    %c0_5 = arith.constant 0 : index
    %c0_6 = arith.constant 0 : index
    %4 = vector.load %arg5[%c0_4, %c0_5, %c0_6] : memref<1x256x128xf32, #tpu.memory_space<vmem>>, vector<1x256x128xf32>
    %5 = vector.shape_cast %4 : vector<1x256x128xf32> to vector<256x128xf32>
    %6 = vector.shape_cast %3 : vector<256x128xf32> to vector<1x256x128xf32>
    tpu.vector_store %arg5[%c0_4, %c0_5, %c0_6], %6 {strides = array<i32>} : memref<1x256x128xf32, #tpu.memory_space<vmem>>, vector<1x256x128xf32>,
    %c0_i32 = arith.constant 0 : i32
    %7 = arith.cmpi eq, %arg2, %c0_i32 : i32
    %8 = arith.extui %7 : i1 to i32
    %c0_i32_7 = arith.constant 0 : i32
    %9 = arith.cmpi ne, %8, %c0_i32_7 : i32
    scf.if %9 {
      %cst_16 = arith.constant 0.000000e+00 : f32
      %22 = vector.broadcast %cst_16 : f32 to vector<1x2x128xf32>
      %c0_17 = arith.constant 0 : index
      %c0_18 = arith.constant 0 : index
      %c0_19 = arith.constant 0 : index
      %23 = vector.load %arg6[%c0_17, %c0_18, %c0_19] : memref<1x2x128xf32, #tpu.memory_space<vmem>>, vector<1x2x128xf32>
      tpu.vector_store %arg6[%c0_17, %c0_18, %c0_19], %22 {strides = array<i32>} : memref<1x2x128xf32, #tpu.memory_space<vmem>>, vector<1x2x128xf32>,
    } else {
    }
    %cst_8 = arith.constant dense<0.000000e+00> : vector<128xf32>
    %10 = vector.multi_reduction <add>, %3, %cst_8 [0] : vector<256x128xf32> to vector<128xf32>
    %11 = vector.shape_cast %10 : vector<128xf32> to vector<1x128xf32>
    %12 = arith.mulf %3, %3 : vector<256x128xf32>
    %cst_9 = arith.constant dense<0.000000e+00> : vector<128xf32>
    %13 = vector.multi_reduction <add>, %12, %cst_9 [0] : vector<256x128xf32> to vector<128xf32>
    %14 = vector.shape_cast %13 : vector<128xf32> to vector<1x128xf32>
    %c0_10 = arith.constant 0 : index
    %c0_11 = arith.constant 0 : index
    %c0_12 = arith.constant 0 : index
    %15 = vector.load %arg6[%c0_10, %c0_11, %c0_12] : memref<1x2x128xf32, #tpu.memory_space<vmem>>, vector<1x2x128xf32>
    %16 = vector.shape_cast %15 : vector<1x2x128xf32> to vector<2x128xf32>
    %17 = tpu.concatenate %11, %14 in 0 : vector<1x128xf32>, vector<1x128xf32> -> vector<2x128xf32>
    %18 = arith.addf %16, %17 : vector<2x128xf32>
    %c0_13 = arith.constant 0 : index
    %c0_14 = arith.constant 0 : index
    %c0_15 = arith.constant 0 : index
    %19 = vector.load %arg6[%c0_13, %c0_14, %c0_15] : memref<1x2x128xf32, #tpu.memory_space<vmem>>, vector<1x2x128xf32>
    %20 = vector.shape_cast %19 : vector<1x2x128xf32> to vector<2x128xf32>
    %21 = vector.shape_cast %18 : vector<2x128xf32> to vector<1x2x128xf32>
    tpu.vector_store %arg6[%c0_13, %c0_14, %c0_15], %21 {strides = array<i32>} : memref<1x2x128xf32, #tpu.memory_space<vmem>>, vector<1x2x128xf32>,
    return
  }
  func.func @transform_0(%arg0: i32, %arg1: i32, %arg2: i32) -> (i32, i32, i32) {
    %c0_i32 = arith.constant 0 : i32
    %c0_i32_0 = arith.constant 0 : i32
    return %arg1, %arg2, %c0_i32 : i32, i32, i32
  }
  func.func @transform_1(%arg0: i32, %arg1: i32, %arg2: i32) -> (i32, i32) {
    %c0_i32 = arith.constant 0 : i32
    %c0_i32_0 = arith.constant 0 : i32
    return %c0_i32, %arg0 : i32, i32
  }
  func.func @transform_2(%arg0: i32, %arg1: i32, %arg2: i32) -> (i32, i32, i32) {
    %c0_i32 = arith.constant 0 : i32
    return %arg1, %arg2, %arg0 : i32, i32, i32
  }
  func.func @transform_3(%arg0: i32, %arg1: i32, %arg2: i32) -> (i32, i32, i32) {
    %c0_i32 = arith.constant 0 : i32
    %c0_i32_0 = arith.constant 0 : i32
    return %arg1, %c0_i32, %arg0 : i32, i32, i32
  }
}

</mosaic_0001>

<llo_original>
// kernel: _matmul_bn_padded.1
$region0: #{_matmul_bn_padded.1}
  #allocation0 [shape = 'u32[]', space=smem, size = 0x4, offset = 0x4, fixed_abs, tag = 'smem constant byte address 0x4 - core index']
  #allocation1 [shape = 'u32[144,128]{1,0:T(1,128)}', space=vmem, size = 0x12000, scoped, tag = 'internal scratch']
  %s0 = inlined_call_operand.hbm [shape: bf16[4,512,128], index: 0, kind: input, shape index: {}]
  %s1 = inlined_call_operand.hbm [shape: bf16[128,128], index: 1, kind: input, shape index: {}]
  %s2 = inlined_call_operand.hbm [shape: f32[4,512,128], index: 2, kind: output, shape index: {0}]
  %s3 = inlined_call_operand.hbm [shape: f32[4,2,128], index: 3, kind: output, shape index: {1}]
  %4 = xla_tuple %s2, %s3
  %s5 = sld [smem:[#allocation0]]
  $region61: #{_matmul_bn_padded.1} parent=0
    _
  %s7 = ssub.s32 1, %s5
  %s8 = scalar_select 0, %s7, %s5
  $region1: #{_matmul_bn_padded.1} parent=0
    #allocation2 [shape = 'u8[131072]{0}', space=vmem, size = 0x20000, scoped, tag = 'input window, operand 0']
    #allocation3 [shape = 's32[2]{0}', space=sflag, size = 0x8, scoped, tag = 'scoped memory for _matmul_bn_padded.1']
    #allocation4 [shape = 's32[2]{0}', space=sflag, size = 0x8, scoped, tag = 'scoped memory for _matmul_bn_padded.1']
    #allocation5 [shape = 'u8[32768]{0}', space=vmem, size = 0x8000, scoped, tag = 'input window, operand 1, single buffered']
    #allocation6 [shape = 's32[1]{0}', space=sflag, size = 0x4, scoped, tag = 'scoped memory for _matmul_bn_padded.1']
    #allocation7 [shape = 'u8[262144]{0}', space=vmem, size = 0x40000, scoped, tag = 'output window, operand 0']
    #allocation8 [shape = 'u8[2048]{0}', space=vmem, size = 0x800, scoped, tag = 'output window, operand 1']
    #allocation9 [shape = 's32[2]{0}', space=sflag, size = 0x8, scoped, tag = 'scoped memory for _matmul_bn_padded.1']
    %9 = vsyncpa [#allocation3], 0
    %s10 = scalar_lea.sflag [#allocation3], 1
    %11 = vsyncpa %s10, 0
    %12 = vsyncpa [#allocation6], 0
    %13 = vsyncpa [#allocation4], 0
    %s14 = scalar_lea.sflag [#allocation4], 1
    %15 = vsyncpa %s14, 0
    %16 = vsyncpa [#allocation9], 0
    %s17 = scalar_lea.sflag [#allocation9], 1
    %18 = vsyncpa %s17, 0
    loop: start=0, step=1, limit=10
    $region2: #{_matmul_bn_padded.1} parent=1 // loop_pre_header
      _
    $region3: #{_matmul_bn_padded.1} parent=1 // loop_header
      %s20 = sphi 0, %s24
      %p21 = scmp.ge.s32.totalorder %s20, 10
      %s27 = sphi 0, %s46
      %s28 = sphi 0, %s42
      %s29 = sphi 0, %s38
      %s30 = sphi 0, %s27
      %s31 = sphi 0, %s28
      %s32 = sphi 0, %s29
      %s33 = sphi 0, %s30
      %s34 = sphi 0, %s31
      %s35 = sphi 0, %s32
      %s51 = sphi 0, %s53
      %s54 = sphi 0, %s51
      %s55 = sphi 0, %s54
      %s71 = sphi 0, %s55
      %s77 = sphi 0, %s79
      %s80 = sphi 0, %s77
      %s81 = sphi 0, %s80
      %s97 = sphi 0, %s81
      %s107 = sphi 0, %s109
      %s110 = sphi 0, %s107
      %s111 = sphi 0, %s110
      %s127 = sphi 0, %s111
      %s135 = sphi 0, %s137
      %s138 = sphi 0, %s135
      %s139 = sphi 0, %s138
      %s155 = sphi 0, %s139
    $region4: #{_matmul_bn_padded.1} parent=1 // loop_header_branch
      %23 = sbr.rel (%p21) target = $region8
    $region5: #{_matmul_bn_padded.1} parent=1 // loop_body
      %s25 = ssub.s32 %s20, 1
      %s26 = ssub.s32 %s20, 2
      %s36 = sadd.s32 1, %s29
      %p37 = scmp.ge.s32.totalorder %s36, 2
      %s38 = scalar_select %p37, 0, %s36
      %s39 = sadd.s32 1, %s28
      %s40 = scalar_select %p37, %s39, %s28
      %p41 = scmp.ge.s32.totalorder %s40, 4
      %s42 = scalar_select %p41, 0, %s40
      %s43 = sadd.s32 1, %s27
      %s44 = scalar_select %p41, %s43, %s27
      %p45 = scmp.ge.s32.totalorder %s44, 1
      %s46 = scalar_select %p45, 0, %s44
      %s47 = ssub.s32 %s28, %s42
      %s48 = ssub.s32 %s29, %s38
      %s49 = sor.u32 %s47, %s48
      %p50 = scmp.eq.s32.totalorder %s49, 0
      %s52 = sadd.s32 %s51, 1
      %s53 = scalar_select %p50, %s51, %s52
      %p56 = pneg %p50
      %p57 = scmp.eq.s32.totalorder %s20, 7
      %p58 = por %p56, %p57
      %p59 = scmp.ne.s32.totalorder %s51, %s54
      %p60 = scmp.eq.s32.totalorder %s20, 0
      %p61 = por %p59, %p60
      %p62 = scmp.ne.s32.totalorder %s51, %s54
      %p63 = scmp.eq.s32.totalorder %s25, 7
      %p64 = por %p62, %p63
      %p65 = scmp.ne.s32.totalorder %s54, %s55
      %p66 = scmp.eq.s32.totalorder %s25, 0
      %p67 = por %p65, %p66
      %p68 = scmp.ne.s32.totalorder %s54, %s55
      %p69 = scmp.eq.s32.totalorder %s26, 7
      %p70 = por %p68, %p69
      %p72 = scmp.ne.s32.totalorder %s55, %s71
      %p73 = scmp.eq.s32.totalorder %s26, 0
      %p74 = por %p72, %p73
      %s75 = ssub.s32 %s27, %s46
      %p76 = scmp.eq.s32.totalorder %s75, 0
      %s78 = sadd.s32 %s77, 1
      %s79 = scalar_select %p76, %s77, %s78
      %p82 = pneg %p76
      %p83 = scmp.eq.s32.totalorder %s20, 7
      %p84 = por %p82, %p83
      %p85 = scmp.ne.s32.totalorder %s77, %s80
      %p86 = scmp.eq.s32.totalorder %s20, 0
      %p87 = por %p85, %p86
      %p88 = scmp.ne.s32.totalorder %s77, %s80
      %p89 = scmp.eq.s32.totalorder %s25, 7
      %p90 = por %p88, %p89
      %p91 = scmp.ne.s32.totalorder %s80, %s81
      %p92 = scmp.eq.s32.totalorder %s25, 0
      %p93 = por %p91, %p92
      %p94 = scmp.ne.s32.totalorder %s80, %s81
      %p95 = scmp.eq.s32.totalorder %s26, 7
      %p96 = por %p94, %p95
      %p98 = scmp.ne.s32.totalorder %s81, %s97
      %p99 = scmp.eq.s32.totalorder %s26, 0
      %p100 = por %p98, %p99
      %s101 = ssub.s32 %s28, %s42
      %s102 = ssub.s32 %s29, %s38
      %s103 = sor.u32 %s101, %s102
      %s104 = ssub.s32 %s27, %s46
      %s105 = sor.u32 %s103, %s104
      %p106 = scmp.eq.s32.totalorder %s105, 0
      %s108 = sadd.s32 %s107, 1
      %s109 = scalar_select %p106, %s107, %s108
      %p112 = pneg %p106
      %p113 = scmp.eq.s32.totalorder %s20, 7
      %p114 = por %p112, %p113
      %p115 = scmp.ne.s32.totalorder %s107, %s110
      %p116 = scmp.eq.s32.totalorder %s20, 0
      %p117 = por %p115, %p116
      %p118 = scmp.ne.s32.totalorder %s107, %s110
      %p119 = scmp.eq.s32.totalorder %s25, 7
      %p120 = por %p118, %p119
      %p121 = scmp.ne.s32.totalorder %s110, %s111
      %p122 = scmp.eq.s32.totalorder %s25, 0
      %p123 = por %p121, %p122
      %p124 = scmp.ne.s32.totalorder %s110, %s111
      %p125 = scmp.eq.s32.totalorder %s26, 7
      %p126 = por %p124, %p125
      %p128 = scmp.ne.s32.totalorder %s111, %s127
      %p129 = scmp.eq.s32.totalorder %s26, 0
      %p130 = por %p128, %p129
      %s131 = ssub.s32 %s28, %s42
      %s132 = ssub.s32 %s27, %s46
      %s133 = sor.u32 %s131, %s132
      %p134 = scmp.eq.s32.totalorder %s133, 0
      %s136 = sadd.s32 %s135, 1
      %s137 = scalar_select %p134, %s135, %s136
      %p140 = pneg %p134
      %p141 = scmp.eq.s32.totalorder %s20, 7
      %p142 = por %p140, %p141
      %p143 = scmp.ne.s32.totalorder %s135, %s138
      %p144 = scmp.eq.s32.totalorder %s20, 0
      %p145 = por %p143, %p144
      %p146 = scmp.ne.s32.totalorder %s135, %s138
      %p147 = scmp.eq.s32.totalorder %s25, 7
      %p148 = por %p146, %p147
      %p149 = scmp.ne.s32.totalorder %s138, %s139
      %p150 = scmp.eq.s32.totalorder %s25, 0
      %p151 = por %p149, %p150
      %p152 = scmp.ne.s32.totalorder %s138, %s139
      %p153 = scmp.eq.s32.totalorder %s26, 7
      %p154 = por %p152, %p153
      %p156 = scmp.ne.s32.totalorder %s139, %s155
      %p157 = scmp.eq.s32.totalorder %s26, 0
      %p158 = por %p156, %p157
      %p159 = scmp.le.s32.totalorder 1, %s20
      %p160 = scmp.lt.s32.totalorder %s20, 9
      %p161 = pnand %p159, %p160
      %p162 = pneg %p161
      // Predicated region
      $region9: #{_matmul_bn_padded.1} parent=5 // pred_check
        _
      $region10: #{_matmul_bn_padded.1} parent=5 // pred_check_branch
        %164 = sbr.rel (%p161) target = $region12
      $region11: #{_matmul_bn_padded.1} parent=5 // pred_region
        %s165 = ssub.s32 %s20, 1
        // Predicated region
        $region13: #{_matmul_bn_padded.1} parent=11 // pred_check
          %p166 = pneg %p93
        $region14: #{_matmul_bn_padded.1} parent=11 // pred_check_branch
          %168 = sbr.rel (%p166) target = $region16
        $region15: #{_matmul_bn_padded.1} parent=11 // pred_region
          %s170 = ssub.s32 1024, 1024
          %171 = vsyncadd [#allocation6], %s170
          %s172 = smul.addr %s30, 64
          %s173 = scalar_lea.hbm %s1, %s172
          %s174 = sshll.u32 [#allocation5], 4
          %s175 = int_to_ptr.vmem [resolvable:$true] %s174
          %180 = dma.hbm_to_vmem [thread:$0]  %s173, 1024, %s175, [#allocation6], 64, 64, 4
        $region16: #{_matmul_bn_padded.1} parent=11 // pred_fallthru
          _
      $region12: #{_matmul_bn_padded.1} parent=5 // pred_fallthru
        _
      %p181 = scmp.lt.s32.totalorder %s20, 8
      // Predicated region
      $region17: #{_matmul_bn_padded.1} parent=5 // pred_check
        %p182 = pneg %p181
      $region18: #{_matmul_bn_padded.1} parent=5 // pred_check_branch
        %184 = sbr.rel (%p182) target = $region20
      $region19: #{_matmul_bn_padded.1} parent=5 // pred_region
        // Predicated region
        $region21: #{_matmul_bn_padded.1} parent=19 // pred_check
          %p185 = pneg %p61
        $region22: #{_matmul_bn_padded.1} parent=19 // pred_check_branch
          %187 = sbr.rel (%p185) target = $region24
        $region23: #{_matmul_bn_padded.1} parent=19 // pred_region
          %s188 = sand.u32 %s51, 1
          %s189 = scalar_lea.sflag [#allocation3], %s188
          %s190 = sand.u32 %s51, 1
          %s191 = smul.addr %s190, 128
          %s192 = scalar_lea.vmem [#allocation2], %s191
          %s193 = smul.u32 32, %s29
          %s195 = ssub.s32 2048, 2048
          %196 = vsyncadd %s189, %s195
          %s197 = smul.addr %s28, 64
          %s198 = sadd.s32 %s193, %s197
          %s199 = smul.addr %s198, 64
          %s200 = scalar_lea.hbm %s0, %s199
          %s201 = sshll.u32 %s192, 4
          %s202 = int_to_ptr.vmem [resolvable:$true] %s201
          %207 = dma.hbm_to_vmem [thread:$0]  %s200, 2048, %s202, %s189, 64, 64, 4
        $region24: #{_matmul_bn_padded.1} parent=19 // pred_fallthru
          _
      $region20: #{_matmul_bn_padded.1} parent=5 // pred_fallthru
        _
      %p208 = scmp.le.s32.totalorder 1, %s20
      %p209 = scmp.lt.s32.totalorder %s20, 9
      %p210 = pnand %p208, %p209
      %p211 = pneg %p210
      // Predicated region
      $region25: #{_matmul_bn_padded.1} parent=5 // pred_check
        _
      $region26: #{_matmul_bn_padded.1} parent=5 // pred_check_branch
        %213 = sbr.rel (%p210) target = $region28
      $region27: #{_matmul_bn_padded.1} parent=5 // pred_region
        %s214 = ssub.s32 %s20, 1
        %s215 = sand.u32 %s54, 1
        %s216 = scalar_lea.sflag [#allocation3], %s215
        %s217 = sand.u32 %s54, 1
        %s218 = smul.addr %s217, 128
        %s219 = scalar_lea.vmem [#allocation2], %s218
        // Predicated region
        $region29: #{_matmul_bn_padded.1} parent=27 // pred_check
          %p220 = pneg %p67
        $region30: #{_matmul_bn_padded.1} parent=27 // pred_check_branch
          %222 = sbr.rel (%p220) target = $region32
        $region31: #{_matmul_bn_padded.1} parent=27 // pred_region
          %223 = dma.done %s216, 2048
        $region32: #{_matmul_bn_padded.1} parent=27 // pred_fallthru
          _
        // Predicated region
        $region33: #{_matmul_bn_padded.1} parent=27 // pred_check
          %p224 = pneg %p93
        $region34: #{_matmul_bn_padded.1} parent=27 // pred_check_branch
          %226 = sbr.rel (%p224) target = $region36
        $region35: #{_matmul_bn_padded.1} parent=27 // pred_region
          %227 = dma.done [#allocation6], 1024
        $region36: #{_matmul_bn_padded.1} parent=27 // pred_fallthru
          _
        %s228 = sand.u32 %s54, 1
        %s229 = scalar_lea.sflag [#allocation3], %s228
        %s230 = sand.u32 %s54, 1
        %s231 = smul.addr %s230, 128
        %s232 = scalar_lea.vmem [#allocation2], %s231
        %p233 = pneg %p67
        %p234 = pneg %p64
        %p235 = pneg %p93
        %p236 = pneg %p90
        %p237 = pneg %p123
        %p238 = pneg %p120
        %s239 = sand.u32 %s110, 1
        %s240 = scalar_lea.sflag [#allocation4], %s239
        %s241 = sand.u32 %s110, 1
        %s242 = smul.addr %s241, 256
        %s243 = scalar_lea.vmem [#allocation7], %s242
        %p244 = pneg %p151
        %p245 = pneg %p148
        %s246 = sand.u32 %s138, 1
        %s247 = scalar_lea.sflag [#allocation9], %s246
        %s248 = sand.u32 %s138, 1
        %s249 = smul.addr %s248, 2
        %s250 = scalar_lea.vmem [#allocation8], %s249
        %s251 = smul.u32 32, %s32
        %s252 = smul.u32 32, %s32
        %v254 = vld [vmem:[%s219] sm:$0xf]
        %v255 = vld [vmem:[%s219 + $0x4] sm:$0xf]
        %v256 = vld [vmem:[%s219 + $0x8] sm:$0xf]
        %v257 = vld [vmem:[%s219 + $0xc] sm:$0xf]
        %v258 = vld [vmem:[%s219 + $0x10] sm:$0xf]
        %v259 = vld [vmem:[%s219 + $0x14] sm:$0xf]
        %v260 = vld [vmem:[%s219 + $0x18] sm:$0xf]
        %v261 = vld [vmem:[%s219 + $0x1c] sm:$0xf]
        %v262 = vld [vmem:[%s219 + $0x20] sm:$0xf]
        %v263 = vld [vmem:[%s219 + $0x24] sm:$0xf]
        %v264 = vld [vmem:[%s219 + $0x28] sm:$0xf]
        %v265 = vld [vmem:[%s219 + $0x2c] sm:$0xf]
        %v266 = vld [vmem:[%s219 + $0x30] sm:$0xf]
        %v267 = vld [vmem:[%s219 + $0x34] sm:$0xf]
        %v268 = vld [vmem:[%s219 + $0x38] sm:$0xf]
        %v269 = vld [vmem:[%s219 + $0x3c] sm:$0xf]
        %v270 = vld [vmem:[%s219 + $0x40] sm:$0xf]
        %v271 = vld [vmem:[%s219 + $0x44] sm:$0xf]
        %v272 = vld [vmem:[%s219 + $0x48] sm:$0xf]
        %v273 = vld [vmem:[%s219 + $0x4c] sm:$0xf]
        %v274 = vld [vmem:[%s219 + $0x50] sm:$0xf]
        %v275 = vld [vmem:[%s219 + $0x54] sm:$0xf]
        %v276 = vld [vmem:[%s219 + $0x58] sm:$0xf]
        %v277 = vld [vmem:[%s219 + $0x5c] sm:$0xf]
        %v278 = vld [vmem:[%s219 + $0x60] sm:$0xf]
        %v279 = vld [vmem:[%s219 + $0x64] sm:$0xf]
        %v280 = vld [vmem:[%s219 + $0x68] sm:$0xf]
        %v281 = vld [vmem:[%s219 + $0x6c] sm:$0xf]
        %v282 = vld [vmem:[%s219 + $0x70] sm:$0xf]
        %v283 = vld [vmem:[%s219 + $0x74] sm:$0xf]
        %v284 = vld [vmem:[%s219 + $0x78] sm:$0xf]
        %v285 = vld [vmem:[%s219 + $0x7c] sm:$0xf]
        %v286 = vld [vmem:[#allocation5] sm:$0xf]
        %v287 = vld [vmem:[#allocation5 + $0x4] sm:$0xf]
        %v288 = vld [vmem:[#allocation5 + $0x8] sm:$0xf]
        %v289 = vld [vmem:[#allocation5 + $0xc] sm:$0xf]
        %v290 = vld [vmem:[#allocation5 + $0x10] sm:$0xf]
        %v291 = vld [vmem:[#allocation5 + $0x14] sm:$0xf]
        %v292 = vld [vmem:[#allocation5 + $0x18] sm:$0xf]
        %v293 = vld [vmem:[#allocation5 + $0x1c] sm:$0xf]
        %v294 = vld [vmem:[#allocation5 + $0x20] sm:$0xf]
        %v295 = vld [vmem:[#allocation5 + $0x24] sm:$0xf]
        %v296 = vld [vmem:[#allocation5 + $0x28] sm:$0xf]
        %v297 = vld [vmem:[#allocation5 + $0x2c] sm:$0xf]
        %v298 = vld [vmem:[#allocation5 + $0x30] sm:$0xf]
        %v299 = vld [vmem:[#allocation5 + $0x34] sm:$0xf]
        %v300 = vld [vmem:[#allocation5 + $0x38] sm:$0xf]
        %v301 = vld [vmem:[#allocation5 + $0x3c] sm:$0xf]
        %v334 = vunpack.c.l.b16 %v254
        %v335 = vunpack.c.l.b16 %v255
        %v336 = vunpack.c.l.b16 %v256
        %v337 = vunpack.c.l.b16 %v257
        %v338 = vunpack.c.l.b16 %v258
        %v339 = vunpack.c.l.b16 %v259
        %v340 = vunpack.c.l.b16 %v260
        %v341 = vunpack.c.l.b16 %v261
        %v342 = vunpack.c.l.b16 %v262
        %v343 = vunpack.c.l.b16 %v263
        %v344 = vunpack.c.l.b16 %v264
        %v345 = vunpack.c.l.b16 %v265
        %v346 = vunpack.c.l.b16 %v266
        %v347 = vunpack.c.l.b16 %v267
        %v348 = vunpack.c.l.b16 %v268
        %v349 = vunpack.c.l.b16 %v269
        %v350 = vunpack.c.l.b16 %v270
        %v351 = vunpack.c.l.b16 %v271
        %v352 = vunpack.c.l.b16 %v272
        %v353 = vunpack.c.l.b16 %v273
        %v354 = vunpack.c.l.b16 %v274
        %v355 = vunpack.c.l.b16 %v275
        %v356 = vunpack.c.l.b16 %v276
        %v357 = vunpack.c.l.b16 %v277
        %v358 = vunpack.c.l.b16 %v278
        %v359 = vunpack.c.l.b16 %v279
        %v360 = vunpack.c.l.b16 %v280
        %v361 = vunpack.c.l.b16 %v281
        %v362 = vunpack.c.l.b16 %v282
        %v363 = vunpack.c.l.b16 %v283
        %v364 = vunpack.c.l.b16 %v284
        %v365 = vunpack.c.l.b16 %v285
        %v366 = vpack.c.b16 %v335, %v334
        %v367 = vpack.c.b16 %v337, %v336
        %v368 = vpack.c.b16 %v339, %v338
        %v369 = vpack.c.b16 %v341, %v340
        %v370 = vpack.c.b16 %v343, %v342
        %v371 = vpack.c.b16 %v345, %v344
        %v372 = vpack.c.b16 %v347, %v346
        %v373 = vpack.c.b16 %v349, %v348
        %v374 = vpack.c.b16 %v351, %v350
        %v375 = vpack.c.b16 %v353, %v352
        %v376 = vpack.c.b16 %v355, %v354
        %v377 = vpack.c.b16 %v357, %v356
        %v378 = vpack.c.b16 %v359, %v358
        %v379 = vpack.c.b16 %v361, %v360
        %v380 = vpack.c.b16 %v363, %v362
        %v381 = vpack.c.b16 %v365, %v364
        %v414 = vunpack.c.l.b16 %v286
        %v415 = vunpack.c.l.b16 %v287
        %v416 = vunpack.c.l.b16 %v288
        %v417 = vunpack.c.l.b16 %v289
        %v418 = vunpack.c.l.b16 %v290
        %v419 = vunpack.c.l.b16 %v291
        %v420 = vunpack.c.l.b16 %v292
        %v421 = vunpack.c.l.b16 %v293
        %v422 = vunpack.c.l.b16 %v294
        %v423 = vunpack.c.l.b16 %v295
        %v424 = vunpack.c.l.b16 %v296
        %v425 = vunpack.c.l.b16 %v297
        %v426 = vunpack.c.l.b16 %v298
        %v427 = vunpack.c.l.b16 %v299
        %v428 = vunpack.c.l.b16 %v300
        %v429 = vunpack.c.l.b16 %v301
        %v430 = vpack.c.b16 %v415, %v414
        %v431 = vpack.c.b16 %v417, %v416
        %v432 = vpack.c.b16 %v419, %v418
        %v433 = vpack.c.b16 %v421, %v420
        %v434 = vpack.c.b16 %v423, %v422
        %v435 = vpack.c.b16 %v425, %v424
        %v436 = vpack.c.b16 %v427, %v426
        %v437 = vpack.c.b16 %v429, %v428
        %446 = vmatprep.subr.bf16.mxu0 0
        %447 = vmatpush1.bf16.msra.mxu0 %v430
        %448 = vmatprep.subr.bf16.mxu0 0
        %449 = vmatpush1.bf16.msra.mxu0 %v431
        %450 = vmatprep.subr.bf16.mxu0 0
        %451 = vmatpush1.bf16.msra.mxu0 %v432
        %452 = vmatprep.subr.bf16.mxu0 0
        %453 = vmatpush1.bf16.msra.mxu0 %v433
        %454 = vmatprep.subr.bf16.mxu0 0
        %455 = vmatpush1.bf16.msra.mxu0 %v434
        %456 = vmatprep.subr.bf16.mxu0 0
        %457 = vmatpush1.bf16.msra.mxu0 %v435
        %458 = vmatprep.subr.bf16.mxu0 0
        %459 = vmatpush1.bf16.msra.mxu0 %v436
        %460 = vmatprep.subr.bf16.mxu0 0
        %461 = vmatpush1.bf16.msra.mxu0 %v437
        %462 = vmatprep.subr.bf16.mxu0 0
        %463 = vmatpush1.bf16.msra.mxu0 0
        %464 = vmatprep.subr.bf16.mxu0 0
        %465 = vmatpush1.bf16.msra.mxu0 0
        %466 = vmatprep.subr.bf16.mxu0 0
        %467 = vmatpush1.bf16.msra.mxu0 0
        %468 = vmatprep.subr.bf16.mxu0 0
        %469 = vmatpush1.bf16.msra.mxu0 0
        %470 = vmatprep.subr.bf16.mxu0 0
        %471 = vmatpush1.bf16.msra.mxu0 0
        %472 = vmatprep.subr.bf16.mxu0 0
        %473 = vmatpush1.bf16.msra.mxu0 0
        %474 = vmatprep.subr.bf16.mxu0 0
        %475 = vmatpush1.bf16.msra.mxu0 0
        %476 = vmatprep.subr.bf16.mxu0 0
        %477 = vmatpush1.bf16.msra.mxu0 0
        %478 = vmatprep.mubr.bf16.mxu0 0
        %479 = vmatmul.mubr.bf16.gmra.mrb[0].mxu0 %v366
        %v480 = vpop.f32.mrb[0].mxu0
        %v481 = vadd.f32 0.0, %v480
        %v482 = vpop.f32.mrb[0].mxu0
        %v483 = vpop.f32.mrb[0].mxu0
        %v484 = vadd.f32 0.0, %v483
        %v485 = vpop.f32.mrb[0].mxu0
        %486 = vmatprep.mubr.bf16.mxu0 0
        %487 = vmatmul.mubr.bf16.gmra.mrb[0].mxu0 %v367
        %v488 = vpop.f32.mrb[0].mxu0
        %v489 = vadd.f32 0.0, %v488
        %v490 = vpop.f32.mrb[0].mxu0
        %v491 = vpop.f32.mrb[0].mxu0
        %v492 = vadd.f32 0.0, %v491
        %v493 = vpop.f32.mrb[0].mxu0
        %494 = vmatprep.mubr.bf16.mxu0 0
        %495 = vmatmul.mubr.bf16.gmra.mrb[0].mxu0 %v368
        %v496 = vpop.f32.mrb[0].mxu0
        %v497 = vadd.f32 0.0, %v496
        %v498 = vpop.f32.mrb[0].mxu0
        %v499 = vpop.f32.mrb[0].mxu0
        %v500 = vadd.f32 0.0, %v499
        %v501 = vpop.f32.mrb[0].mxu0
        %502 = vmatprep.mubr.bf16.mxu0 0
        %503 = vmatmul.mubr.bf16.gmra.mrb[0].mxu0 %v369
        %v504 = vpop.f32.mrb[0].mxu0
        %v505 = vadd.f32 0.0, %v504
        %v506 = vpop.f32.mrb[0].mxu0
        %v507 = vpop.f32.mrb[0].mxu0
        %v508 = vadd.f32 0.0, %v507
        %v509 = vpop.f32.mrb[0].mxu0
        %510 = vmatprep.mubr.bf16.mxu0 0
        %511 = vmatmul.mubr.bf16.gmra.mrb[0].mxu0 %v370
        %v512 = vpop.f32.mrb[0].mxu0
        %v513 = vadd.f32 0.0, %v512
        %v514 = vpop.f32.mrb[0].mxu0
        %v515 = vpop.f32.mrb[0].mxu0
        %v516 = vadd.f32 0.0, %v515
        %v517 = vpop.f32.mrb[0].mxu0
        %518 = vmatprep.mubr.bf16.mxu0 0
        %519 = vmatmul.mubr.bf16.gmra.mrb[0].mxu0 %v371
        %v520 = vpop.f32.mrb[0].mxu0
        %v521 = vadd.f32 0.0, %v520
        %v522 = vpop.f32.mrb[0].mxu0
        %v523 = vpop.f32.mrb[0].mxu0
        %v524 = vadd.f32 0.0, %v523
        %v525 = vpop.f32.mrb[0].mxu0
        %526 = vmatprep.mubr.bf16.mxu0 0
        %527 = vmatmul.mubr.bf16.gmra.mrb[0].mxu0 %v372
        %v528 = vpop.f32.mrb[0].mxu0
        %v529 = vadd.f32 0.0, %v528
        %v530 = vpop.f32.mrb[0].mxu0
        %v531 = vpop.f32.mrb[0].mxu0
        %v532 = vadd.f32 0.0, %v531
        %v533 = vpop.f32.mrb[0].mxu0
        %534 = vmatprep.mubr.bf16.mxu0 0
        %535 = vmatmul.mubr.bf16.gmra.mrb[0].mxu0 %v373
        %v536 = vpop.f32.mrb[0].mxu0
        %v537 = vadd.f32 0.0, %v536
        %v538 = vpop.f32.mrb[0].mxu0
        %v539 = vpop.f32.mrb[0].mxu0
        %v540 = vadd.f32 0.0, %v539
        %v541 = vpop.f32.mrb[0].mxu0
        %542 = vmatprep.mubr.bf16.mxu0 0
        %543 = vmatmul.mubr.bf16.gmra.mrb[0].mxu0 %v374
        %v544 = vpop.f32.mrb[0].mxu0
        %v545 = vadd.f32 0.0, %v544
        %v546 = vpop.f32.mrb[0].mxu0
        %v547 = vpop.f32.mrb[0].mxu0
        %v548 = vadd.f32 0.0, %v547
        %v549 = vpop.f32.mrb[0].mxu0
        %550 = vmatprep.mubr.bf16.mxu0 0
        %551 = vmatmul.mubr.bf16.gmra.mrb[0].mxu0 %v375
        %v552 = vpop.f32.mrb[0].mxu0
        %v553 = vadd.f32 0.0, %v552
        %v554 = vpop.f32.mrb[0].mxu0
        %v555 = vpop.f32.mrb[0].mxu0
        %v556 = vadd.f32 0.0, %v555
        %v557 = vpop.f32.mrb[0].mxu0
        %558 = vmatprep.mubr.bf16.mxu0 0
        %559 = vmatmul.mubr.bf16.gmra.mrb[0].mxu0 %v376
        %v560 = vpop.f32.mrb[0].mxu0
        %v561 = vadd.f32 0.0, %v560
        %v562 = vpop.f32.mrb[0].mxu0
        %v563 = vpop.f32.mrb[0].mxu0
        %v564 = vadd.f32 0.0, %v563
        %v565 = vpop.f32.mrb[0].mxu0
        %566 = vmatprep.mubr.bf16.mxu0 0
        %567 = vmatmul.mubr.bf16.gmra.mrb[0].mxu0 %v377
        %v568 = vpop.f32.mrb[0].mxu0
        %v569 = vadd.f32 0.0, %v568
        %v570 = vpop.f32.mrb[0].mxu0
        %v571 = vpop.f32.mrb[0].mxu0
        %v572 = vadd.f32 0.0, %v571
        %v573 = vpop.f32.mrb[0].mxu0
        %574 = vmatprep.mubr.bf16.mxu0 0
        %575 = vmatmul.mubr.bf16.gmra.mrb[0].mxu0 %v378
        %v576 = vpop.f32.mrb[0].mxu0
        %v577 = vadd.f32 0.0, %v576
        %v578 = vpop.f32.mrb[0].mxu0
        %v579 = vpop.f32.mrb[0].mxu0
        %v580 = vadd.f32 0.0, %v579
        %v581 = vpop.f32.mrb[0].mxu0
        %582 = vmatprep.mubr.bf16.mxu0 0
        %583 = vmatmul.mubr.bf16.gmra.mrb[0].mxu0 %v379
        %v584 = vpop.f32.mrb[0].mxu0
        %v585 = vadd.f32 0.0, %v584
        %v586 = vpop.f32.mrb[0].mxu0
        %v587 = vpop.f32.mrb[0].mxu0
        %v588 = vadd.f32 0.0, %v587
        %v589 = vpop.f32.mrb[0].mxu0
        %590 = vmatprep.mubr.bf16.mxu0 0
        %591 = vmatmul.mubr.bf16.gmra.mrb[0].mxu0 %v380
        %v592 = vpop.f32.mrb[0].mxu0
        %v593 = vadd.f32 0.0, %v592
        %v594 = vpop.f32.mrb[0].mxu0
        %v595 = vpop.f32.mrb[0].mxu0
        %v596 = vadd.f32 0.0, %v595
        %v597 = vpop.f32.mrb[0].mxu0
        %598 = vmatprep.mubr.bf16.mxu0 0
        %599 = vmatmul.mubr.bf16.gmra.mrb[0].mxu0 %v381
        %v600 = vpop.f32.mrb[0].mxu0
        %v601 = vadd.f32 0.0, %v600
        %v602 = vpop.f32.mrb[0].mxu0
        %v603 = vpop.f32.mrb[0].mxu0
        %v604 = vadd.f32 0.0, %v603
        %v605 = vpop.f32.mrb[0].mxu0
        %606 = vdwg.mxu0
        %607 = vst [vmem:[%s243] sm:$0xff] %v481
        %608 = vst [vmem:[%s243 + $0x8] sm:$0xff] %v484
        %609 = vst [vmem:[%s243 + $0x10] sm:$0xff] %v489
        %610 = vst [vmem:[%s243 + $0x18] sm:$0xff] %v492
        %611 = vst [vmem:[%s243 + $0x20] sm:$0xff] %v497
        %612 = vst [vmem:[%s243 + $0x28] sm:$0xff] %v500
        %613 = vst [vmem:[%s243 + $0x30] sm:$0xff] %v505
        %614 = vst [vmem:[%s243 + $0x38] sm:$0xff] %v508
        %615 = vst [vmem:[%s243 + $0x40] sm:$0xff] %v513
        %616 = vst [vmem:[%s243 + $0x48] sm:$0xff] %v516
        %617 = vst [vmem:[%s243 + $0x50] sm:$0xff] %v521
        %618 = vst [vmem:[%s243 + $0x58] sm:$0xff] %v524
        %619 = vst [vmem:[%s243 + $0x60] sm:$0xff] %v529
        %620 = vst [vmem:[%s243 + $0x68] sm:$0xff] %v532
        %621 = vst [vmem:[%s243 + $0x70] sm:$0xff] %v537
        %622 = vst [vmem:[%s243 + $0x78] sm:$0xff] %v540
        %623 = vst [vmem:[%s243 + $0x80] sm:$0xff] %v545
        %624 = vst [vmem:[%s243 + $0x88] sm:$0xff] %v548
        %625 = vst [vmem:[%s243 + $0x90] sm:$0xff] %v553
        %626 = vst [vmem:[%s243 + $0x98] sm:$0xff] %v556
        %627 = vst [vmem:[%s243 + $0xa0] sm:$0xff] %v561
        %628 = vst [vmem:[%s243 + $0xa8] sm:$0xff] %v564
        %629 = vst [vmem:[%s243 + $0xb0] sm:$0xff] %v569
        %630 = vst [vmem:[%s243 + $0xb8] sm:$0xff] %v572
        %631 = vst [vmem:[%s243 + $0xc0] sm:$0xff] %v577
        %632 = vst [vmem:[%s243 + $0xc8] sm:$0xff] %v580
        %633 = vst [vmem:[%s243 + $0xd0] sm:$0xff] %v585
        %634 = vst [vmem:[%s243 + $0xd8] sm:$0xff] %v588
        %635 = vst [vmem:[%s243 + $0xe0] sm:$0xff] %v593
        %636 = vst [vmem:[%s243 + $0xe8] sm:$0xff] %v596
        %637 = vst [vmem:[%s243 + $0xf0] sm:$0xff] %v601
        %638 = vst [vmem:[%s243 + $0xf8] sm:$0xff] %v604
        %p639 = scmp.eq.s32.totalorder %s32, 0
        // Predicated region
        $region37: #{_matmul_bn_padded.1} parent=27 // pred_check
          %p640 = pneg %p639
        $region38: #{_matmul_bn_padded.1} parent=27 // pred_check_branch
          %642 = sbr.rel (%p640) target = $region40
        $region39: #{_matmul_bn_padded.1} parent=27 // pred_region
          %643 = vst [vmem:[%s250] sm:$0x3] 0.0
        $region40: #{_matmul_bn_padded.1} parent=27 // pred_fallthru
          _
        %v644 = vadd.f32 %v481, %v484
        %v645 = vadd.f32 %v644, %v489
        %v646 = vadd.f32 %v645, %v492
        %v647 = vadd.f32 %v646, %v497
        %v648 = vadd.f32 %v647, %v500
        %v649 = vadd.f32 %v648, %v505
        %v650 = vadd.f32 %v649, %v508
        %v651 = vadd.f32 %v650, %v513
        %v652 = vadd.f32 %v651, %v516
        %v653 = vadd.f32 %v652, %v521
        %v654 = vadd.f32 %v653, %v524
        %v655 = vadd.f32 %v654, %v529
        %v656 = vadd.f32 %v655, %v532
        %v657 = vadd.f32 %v656, %v537
        %v658 = vadd.f32 %v657, %v540
        %v659 = vadd.f32 %v658, %v545
        %v660 = vadd.f32 %v659, %v548
        %v661 = vadd.f32 %v660, %v553
        %v662 = vadd.f32 %v661, %v556
        %v663 = vadd.f32 %v662, %v561
        %v664 = vadd.f32 %v663, %v564
        %v665 = vadd.f32 %v664, %v569
        %v666 = vadd.f32 %v665, %v572
        %v667 = vadd.f32 %v666, %v577
        %v668 = vadd.f32 %v667, %v580
        %v669 = vadd.f32 %v668, %v585
        %v670 = vadd.f32 %v669, %v588
        %v671 = vadd.f32 %v670, %v593
        %v672 = vadd.f32 %v671, %v596
        %v673 = vadd.f32 %v672, %v601
        %v674 = vadd.f32 %v673, %v604
        %v675 = vrot.slane %v674, 4
        %v676 = vadd.f32 %v674, %v675
        %v677 = vrot.slane %v676, 2
        %v678 = vadd.f32 %v676, %v677
        %v679 = vrot.slane %v678, 1
        %v680 = vadd.f32 %v678, %v679
        %v681 = vmul.f32 %v481, %v481
        %v682 = vmul.f32 %v484, %v484
        %v683 = vmul.f32 %v489, %v489
        %v684 = vmul.f32 %v492, %v492
        %v685 = vmul.f32 %v497, %v497
        %v686 = vmul.f32 %v500, %v500
        %v687 = vmul.f32 %v505, %v505
        %v688 = vmul.f32 %v508, %v508
        %v689 = vmul.f32 %v513, %v513
        %v690 = vmul.f32 %v516, %v516
        %v691 = vmul.f32 %v521, %v521
        %v692 = vmul.f32 %v524, %v524
        %v693 = vmul.f32 %v529, %v529
        %v694 = vmul.f32 %v532, %v532
        %v695 = vmul.f32 %v537, %v537
        %v696 = vmul.f32 %v540, %v540
        %v697 = vmul.f32 %v545, %v545
        %v698 = vmul.f32 %v548, %v548
        %v699 = vmul.f32 %v553, %v553
        %v700 = vmul.f32 %v556, %v556
        %v701 = vmul.f32 %v561, %v561
        %v702 = vmul.f32 %v564, %v564
        %v703 = vmul.f32 %v569, %v569
        %v704 = vmul.f32 %v572, %v572
        %v705 = vmul.f32 %v577, %v577
        %v706 = vmul.f32 %v580, %v580
        %v707 = vmul.f32 %v585, %v585
        %v708 = vmul.f32 %v588, %v588
        %v709 = vmul.f32 %v593, %v593
        %v710 = vmul.f32 %v596, %v596
        %v711 = vmul.f32 %v601, %v601
        %v712 = vmul.f32 %v604, %v604
        %v713 = vadd.f32 %v681, %v682
        %v714 = vadd.f32 %v713, %v683
        %v715 = vadd.f32 %v714, %v684
        %v716 = vadd.f32 %v715, %v685
        %v717 = vadd.f32 %v716, %v686
        %v718 = vadd.f32 %v717, %v687
        %v719 = vadd.f32 %v718, %v688
        %v720 = vadd.f32 %v719, %v689
        %v721 = vadd.f32 %v720, %v690
        %v722 = vadd.f32 %v721, %v691
        %v723 = vadd.f32 %v722, %v692
        %v724 = vadd.f32 %v723, %v693
        %v725 = vadd.f32 %v724, %v694
        %v726 = vadd.f32 %v725, %v695
        %v727 = vadd.f32 %v726, %v696
        %v728 = vadd.f32 %v727, %v697
        %v729 = vadd.f32 %v728, %v698
        %v730 = vadd.f32 %v729, %v699
        %v731 = vadd.f32 %v730, %v700
        %v732 = vadd.f32 %v731, %v701
        %v733 = vadd.f32 %v732, %v702
        %v734 = vadd.f32 %v733, %v703
        %v735 = vadd.f32 %v734, %v704
        %v736 = vadd.f32 %v735, %v705
        %v737 = vadd.f32 %v736, %v706
        %v738 = vadd.f32 %v737, %v707
        %v739 = vadd.f32 %v738, %v708
        %v740 = vadd.f32 %v739, %v709
        %v741 = vadd.f32 %v740, %v710
        %v742 = vadd.f32 %v741, %v711
        %v743 = vadd.f32 %v742, %v712
        %v744 = vrot.slane %v743, 4
        %v745 = vadd.f32 %v743, %v744
        %v746 = vrot.slane %v745, 2
        %v747 = vadd.f32 %v745, %v746
        %v748 = vrot.slane %v747, 1
        %v749 = vadd.f32 %v747, %v748
        %v750 = vld [vmem:[%s250] sm:$0x3]
        %vm751 = vcmask 1040384
        %v752 = vsel %vm751, %v680, %v749
        %v753 = vadd.f32 %v750, %v752
        %754 = vst [vmem:[%s250] sm:$0x3] %v753
        %s755 = sand.u32 %s110, 1
        %s756 = scalar_lea.sflag [#allocation4], %s755
        %s757 = sand.u32 %s110, 1
        %s758 = smul.addr %s757, 256
        %s759 = scalar_lea.vmem [#allocation7], %s758
        %s760 = sand.u32 %s138, 1
        %s761 = scalar_lea.sflag [#allocation9], %s760
        %s762 = sand.u32 %s138, 1
        %s763 = smul.addr %s762, 2
        %s764 = scalar_lea.vmem [#allocation8], %s763
        // Predicated region
        $region41: #{_matmul_bn_padded.1} parent=27 // pred_check
          %p765 = pneg %p120
        $region42: #{_matmul_bn_padded.1} parent=27 // pred_check_branch
          %767 = sbr.rel (%p765) target = $region44
        $region43: #{_matmul_bn_padded.1} parent=27 // pred_region
          %s768 = smul.u32 32, %s32
          %s770 = ssub.s32 4096, 4096
          %771 = vsyncadd %s756, %s770
          %s772 = sadd.s32 %s30, %s768
          %s773 = smul.addr %s31, 64
          %s774 = sadd.s32 %s772, %s773
          %s775 = smul.addr %s774, 128
          %s776 = scalar_lea.hbm %s2, %s775
          %s777 = sshll.u32 %s759, 4
          %s778 = int_to_ptr.vmem [resolvable:$true] %s777
          %783 = dma.vmem_to_hbm [thread:$0]  %s778, 4096, %s776, %s756, 128, 128, 8
        $region44: #{_matmul_bn_padded.1} parent=27 // pred_fallthru
          _
        // Predicated region
        $region45: #{_matmul_bn_padded.1} parent=27 // pred_check
          %p784 = pneg %p148
        $region46: #{_matmul_bn_padded.1} parent=27 // pred_check_branch
          %786 = sbr.rel (%p784) target = $region48
        $region47: #{_matmul_bn_padded.1} parent=27 // pred_region
          %s788 = ssub.s32 32, 32
          %789 = vsyncadd %s761, %s788
          %s790 = sadd.s32 %s30, %s31
          %s791 = smul.addr %s790, 32
          %s792 = scalar_lea.hbm %s3, %s791
          %s794 = sshll.u32 %s764, 4
          %s795 = int_to_ptr.vmem [resolvable:$true] %s794
          %797 = dma.vmem_to_hbm [thread:$0]  %s795, 32, %s792, %s761
        $region48: #{_matmul_bn_padded.1} parent=27 // pred_fallthru
          _
      $region28: #{_matmul_bn_padded.1} parent=5 // pred_fallthru
        _
      %p798 = scmp.le.s32.totalorder 2, %s20
      // Predicated region
      $region49: #{_matmul_bn_padded.1} parent=5 // pred_check
        %p799 = pneg %p798
      $region50: #{_matmul_bn_padded.1} parent=5 // pred_check_branch
        %801 = sbr.rel (%p799) target = $region52
      $region51: #{_matmul_bn_padded.1} parent=5 // pred_region
        %s802 = ssub.s32 %s20, 2
        // Predicated region
        $region53: #{_matmul_bn_padded.1} parent=51 // pred_check
          %p803 = pneg %p126
        $region54: #{_matmul_bn_padded.1} parent=51 // pred_check_branch
          %805 = sbr.rel (%p803) target = $region56
        $region55: #{_matmul_bn_padded.1} parent=51 // pred_region
          %s806 = sand.u32 %s111, 1
          %s807 = scalar_lea.sflag [#allocation4], %s806
          %s808 = sand.u32 %s111, 1
          %s809 = smul.addr %s808, 256
          %s810 = scalar_lea.vmem [#allocation7], %s809
          %811 = dma.done %s807, 4096
        $region56: #{_matmul_bn_padded.1} parent=51 // pred_fallthru
          _
        // Predicated region
        $region57: #{_matmul_bn_padded.1} parent=51 // pred_check
          %p812 = pneg %p154
        $region58: #{_matmul_bn_padded.1} parent=51 // pred_check_branch
          %814 = sbr.rel (%p812) target = $region60
        $region59: #{_matmul_bn_padded.1} parent=51 // pred_region
          %s815 = sand.u32 %s139, 1
          %s816 = scalar_lea.sflag [#allocation9], %s815
          %s817 = sand.u32 %s139, 1
          %s818 = smul.addr %s817, 2
          %s819 = scalar_lea.vmem [#allocation8], %s818
          %820 = dma.done %s816, 32
        $region60: #{_matmul_bn_padded.1} parent=51 // pred_fallthru
          _
      $region52: #{_matmul_bn_padded.1} parent=5 // pred_fallthru
        _
    $region6: #{_matmul_bn_padded.1} parent=1 // loop_footer
      %s24 = sadd.s32 1, %s20
    $region7: #{_matmul_bn_padded.1} parent=1 // loop_footer_branch
      %19 = sbr.rel target = $region3
    $region8: #{_matmul_bn_padded.1} parent=1 // loop_exit
      _
    %821 = vsyncpa [#allocation3], 1
    %s822 = scalar_lea.sflag [#allocation3], 1
    %823 = vsyncpa %s822, 1
    %824 = vsyncpa [#allocation6], 1
    %825 = vsyncpa [#allocation4], 1
    %s826 = scalar_lea.sflag [#allocation4], 1
    %827 = vsyncpa %s826, 1
    %828 = vsyncpa [#allocation9], 1
    %s829 = scalar_lea.sflag [#allocation9], 1
    %830 = vsyncpa %s829, 1

</llo_original>
